<compile_context>
chip_gen: v6e
topology: v6e:2x2x1
jax: 0.10.0
libtpu: 0.0.40
codegen_flags: <defaults>
</compile_context>

<pallas_src>
import functools

import jax
import jax.numpy as jnp
from jax import lax
from jax.experimental import pallas as pl
from jax.experimental.pallas import tpu as pltpu


def _nll_kernel(pred_ref, tgt_ref, out_ref, acc_ref, *, n_total, tile_n, k_tiles):
    # pred_ref: (tile_n, C) input dtype; tgt_ref: (tile_n, 1) int32
    # out_ref:  (1, 1, 1) f32 per parallel chunk
    # acc_ref:  (tile_n, 1) f32 per-row running partial (persists over inner axis)
    p = pl.program_id(0)   # parallel chunk (megacore on v7x)
    k = pl.program_id(1)   # serial tile within the chunk

    @pl.when(k == 0)
    def _():
        acc_ref[...] = jnp.zeros_like(acc_ref)

    x = pred_ref[...].astype(jnp.float32)          # (tile_n, C), in-register cast
    tgt = tgt_ref[...]                             # (tile_n, 1) int32

    # Row-validity mask. pred is NOT padded in HBM: the tail block (and any
    # clamped redundant block) may contain garbage rows; the select below zeroes
    # their contribution (select, not multiply, so NaN/inf cannot propagate).
    block_idx = p * k_tiles + k
    row = lax.broadcasted_iota(jnp.int32, (tile_n, 1), 0) + block_idx * tile_n
    valid = row < n_total                          # (tile_n, 1)

    # Numerically stable logsumexp over the class (lane) dim.
    m = jnp.max(x, axis=-1, keepdims=True)                                # (tile_n, 1)
    lse = jnp.log(jnp.sum(jnp.exp(x - m), axis=-1, keepdims=True)) + m    # (tile_n, 1)

    # Gather x[n, tgt[n]] via a one-hot select (no dynamic VMEM gather on TPU).
    col = lax.broadcasted_iota(jnp.int32, x.shape, 1)
    picked = jnp.sum(jnp.where(col == tgt, x, 0.0), axis=-1, keepdims=True)

    # Per-row masked NLL accumulated as a vector; scalar reduce only at the end.
    acc_ref[...] += jnp.where(valid, lse - picked, 0.0)

    @pl.when(k == pl.num_programs(1) - 1)
    def _():
        out_ref[...] = jnp.sum(acc_ref[...], keepdims=True)[None]   # (1,1,1)


def _pick_tile_n(n_rows, c, itemsize, *, target_bytes=2 << 20, vmem_budget=32 << 20):
    """Rows per grid step: ~target_bytes of pred per step, VMEM-feasible, mult of 8."""
    tile = target_bytes // max(1, c * itemsize)
    # Feasibility: 2 double-buffered pred blocks + ~4 full-tile f32 temporaries.
    per_row = 2 * c * itemsize + 4 * c * 4 + 2 * 128 * 4
    tile = min(tile, vmem_budget // per_row)
    tile = min(tile, ((n_rows + 7) // 8) * 8)      # never bigger than the row count
    tile = max(8, (tile // 8) * 8)
    return int(tile)


def loss_evaluator(pred, real, *, tile_n=None, num_chunks=2):
    """pred: (B, T, C) float, real: (B, T) int  ->  scalar mean NLL loss."""
    B, T, C = pred.shape
    N = B * T
    pred2 = pred.reshape(N, C)
    tgt2 = real.reshape(N, 1).astype(jnp.int32)

    if tile_n is None:
        tile_n = _pick_tile_n(N, C, jnp.dtype(pred.dtype).itemsize)
    tile_n = max(8, min((tile_n // 8) * 8, ((N + 7) // 8) * 8))

    num_tiles = pl.cdiv(N, tile_n)              # row tiles over the whole problem
    P = max(1, min(num_chunks, num_tiles))      # parallel chunks (2 TCs on v7x)
    K = pl.cdiv(num_tiles, P)                   # serial tiles per chunk
    last_block = num_tiles - 1

    def row_block(p, k):
        # Clamp fully-redundant trailing blocks onto a valid block; the in-kernel
        # row mask zeroes their contribution anyway.
        return (jnp.minimum(p * K + k, last_block), 0)

    kernel = functools.partial(_nll_kernel, n_total=N, tile_n=tile_n, k_tiles=K)

    partials = pl.pallas_call(
        kernel,
        out_shape=jax.ShapeDtypeStruct((P, 1, 1), jnp.float32),
        grid_spec=pltpu.PrefetchScalarGridSpec(
            num_scalar_prefetch=0,
            grid=(P, K),
            in_specs=[
                pl.BlockSpec((tile_n, C), row_block),
                pl.BlockSpec((tile_n, 1), row_block),
            ],
            out_specs=pl.BlockSpec((1, 1, 1), lambda p, k: (p, 0, 0)),
            scratch_shapes=[pltpu.VMEM((tile_n, 1), jnp.float32)],
        ),
        compiler_params=pltpu.CompilerParams(
            dimension_semantics=("parallel", "arbitrary"),
            vmem_limit_bytes=48 * 1024 * 1024,   # stays under v7x's 64 MiB physical VMEM
        ),
    )(pred2, tgt2)

    return jnp.sum(partials) / jnp.float32(N)


def _reference(pred, real):
    # pure-JAX reference of the PyTorch module for sanity checking
    logp = jax.nn.log_softmax(pred.astype(jnp.float32), axis=-1)   # (B, T, C)
    picked = jnp.take_along_axis(logp, real[..., None].astype(jnp.int32), axis=-1)
    return -jnp.mean(picked)


if __name__ == "__main__":
    key = jax.random.PRNGKey(0)
    k1, k2 = jax.random.split(key)

    # Small shapes consistent with the module: batch=2, seq=8, classes=32.
    B, T, C = 2, 8, 32
    pred = jax.random.normal(k1, (B, T, C), dtype=jnp.float32)
    real = jax.random.randint(k2, (B, T), 0, C, dtype=jnp.int32)

    loss = loss_evaluator(pred, real)
    jax.block_until_ready(loss)
    ref = _reference(pred, real)
    assert jnp.allclose(loss, ref, atol=1e-5, rtol=1e-5), (loss, ref)

    # Multi-tile, non-divisible bf16 case: exercises the 2-D (parallel, arbitrary)
    # grid, the unpadded tail-block masking, and the per-chunk partial reduction.
    B2, T2, C2 = 3, 37, 160
    p2 = jax.random.normal(k1, (B2, T2, C2), dtype=jnp.bfloat16)
    r2 = jax.random.randint(k2, (B2, T2), 0, C2, dtype=jnp.int32)
    l2 = loss_evaluator(p2, r2, tile_n=32)          # forces grid (2, 2)
    jax.block_until_ready(l2)
    ref2 = _reference(p2, r2)
    assert jnp.allclose(l2, ref2, atol=2e-2, rtol=2e-2), (l2, ref2)

    print("KERNEL_OK")
</pallas_src>

<mosaic_0001>
module attributes {stable_mosaic.version = 11 : i64} {
  func.func @_nll_kernel(%arg0: i32, %arg1: i32, %arg2: memref<16x32xf32, #tpu.memory_space<vmem>>, %arg3: memref<16x1xi32, #tpu.memory_space<vmem>>, %arg4: memref<1x1x1xf32, #tpu.memory_space<vmem>>, %arg5: memref<16x1xf32, #tpu.memory_space<vmem>>) attributes {dimension_semantics = [#tpu.dimension_semantics<parallel>, #tpu.dimension_semantics<arbitrary>], iteration_bounds = array<i64: 1, 1>, scalar_prefetch = 0 : i64, scratch_operands = 1 : i64, tpu.core_type = #tpu.core_type<tc>, window_params = [{transform_indices = @transform_0, window_bounds = array<i64: 16, 32>}, {transform_indices = @transform_1, window_bounds = array<i64: 16, 1>}, {transform_indices = @transform_2, window_bounds = array<i64: 1, 1, 1>}]} {
    %c0_i32 = arith.constant 0 : i32
    %0 = arith.cmpi eq, %arg1, %c0_i32 : i32
    %1 = arith.extui %0 : i1 to i32
    %c0_i32_0 = arith.constant 0 : i32
    %2 = arith.cmpi ne, %1, %c0_i32_0 : i32
    scf.if %2 {
      %cst_15 = arith.constant 0.000000e+00 : f32
      %38 = vector.broadcast %cst_15 : f32 to vector<16x1xf32>
      %c0_16 = arith.constant 0 : index
      %c0_17 = arith.constant 0 : index
      %39 = vector.load %arg5[%c0_16, %c0_17] : memref<16x1xf32, #tpu.memory_space<vmem>>, vector<16x1xf32>
      tpu.vector_store %arg5[%c0_16, %c0_17], %38 {strides = array<i32>} : memref<16x1xf32, #tpu.memory_space<vmem>>, vector<16x1xf32>,
    } else {
    }
    %c0 = arith.constant 0 : index
    %c0_1 = arith.constant 0 : index
    %3 = vector.load %arg2[%c0, %c0_1] : memref<16x32xf32, #tpu.memory_space<vmem>>, vector<16x32xf32>
    %c0_2 = arith.constant 0 : index
    %c0_3 = arith.constant 0 : index
    %4 = vector.load %arg3[%c0_2, %c0_3] : memref<16x1xi32, #tpu.memory_space<vmem>>, vector<16x1xi32>
    %c1_i32 = arith.constant 1 : i32
    %5 = arith.muli %arg0, %c1_i32 : i32
    %6 = arith.addi %5, %arg1 : i32
    %7 = tpu.iota {dimensions = array<i32: 0>} : vector<16x1xi32>
    %c16_i32 = arith.constant 16 : i32
    %8 = arith.muli %6, %c16_i32 : i32
    %9 = vector.broadcast %8 : i32 to vector<16x1xi32>
    %10 = arith.addi %7, %9 : vector<16x1xi32>
    %c16_i32_4 = arith.constant 16 : i32
    %11 = vector.broadcast %c16_i32_4 : i32 to vector<16x1xi32>
    %12 = arith.cmpi slt, %10, %11 : vector<16x1xi32>
    %cst = arith.constant dense<0xFF800000> : vector<16xf32>
    %13 = vector.multi_reduction <maximumf>, %3, %cst [1] : vector<16x32xf32> to vector<16xf32>
    %14 = vector.shape_cast %13 : vector<16xf32> to vector<16x1xf32>
    %15 = vector.broadcast %14 : vector<16x1xf32> to vector<16x32xf32>
    %16 = arith.subf %3, %15 : vector<16x32xf32>
    %17 = math.exp %16 : vector<16x32xf32>
    %cst_5 = arith.constant dense<0.000000e+00> : vector<16xf32>
    %18 = vector.multi_reduction <add>, %17, %cst_5 [1] : vector<16x32xf32> to vector<16xf32>
    %19 = vector.shape_cast %18 : vector<16xf32> to vector<16x1xf32>
    %20 = math.log %19 : vector<16x1xf32>
    %21 = arith.addf %20, %14 : vector<16x1xf32>
    %22 = tpu.iota {dimensions = array<i32: 1>} : vector<16x32xi32>
    %23 = vector.broadcast %4 : vector<16x1xi32> to vector<16x32xi32>
    %24 = arith.cmpi eq, %22, %23 : vector<16x32xi32>
    %cst_6 = arith.constant 0.000000e+00 : f32
    %25 = vector.broadcast %cst_6 : f32 to vector<16x32xf32>
    %26 = arith.select %24, %3, %25 : vector<16x32xi1>, vector<16x32xf32>
    %cst_7 = arith.constant dense<0.000000e+00> : vector<16xf32>
    %27 = vector.multi_reduction <add>, %26, %cst_7 [1] : vector<16x32xf32> to vector<16xf32>
    %28 = vector.shape_cast %27 : vector<16xf32> to vector<16x1xf32>
    %c0_8 = arith.constant 0 : index
    %c0_9 = arith.constant 0 : index
    %29 = vector.load %arg5[%c0_8, %c0_9] : memref<16x1xf32, #tpu.memory_space<vmem>>, vector<16x1xf32>
    %30 = arith.subf %21, %28 : vector<16x1xf32>
    %cst_10 = arith.constant 0.000000e+00 : f32
    %31 = vector.broadcast %cst_10 : f32 to vector<16x1xf32>
    %32 = arith.select %12, %30, %31 : vector<16x1xi1>, vector<16x1xf32>
    %33 = arith.addf %29, %32 : vector<16x1xf32>
    %c0_11 = arith.constant 0 : index
    %c0_12 = arith.constant 0 : index
    %34 = vector.load %arg5[%c0_11, %c0_12] : memref<16x1xf32, #tpu.memory_space<vmem>>, vector<16x1xf32>
    tpu.vector_store %arg5[%c0_11, %c0_12], %33 {strides = array<i32>} : memref<16x1xf32, #tpu.memory_space<vmem>>, vector<16x1xf32>,
    %c0_i32_13 = arith.constant 0 : i32
    %35 = arith.cmpi eq, %arg1, %c0_i32_13 : i32
    %36 = arith.extui %35 : i1 to i32
    %c0_i32_14 = arith.constant 0 : i32
    %37 = arith.cmpi ne, %36, %c0_i32_14 : i32
    scf.if %37 {
      %c0_15 = arith.constant 0 : index
      %c0_16 = arith.constant 0 : index
      %38 = vector.load %arg5[%c0_15, %c0_16] : memref<16x1xf32, #tpu.memory_space<vmem>>, vector<16x1xf32>
      %39 = vector.shape_cast %38 : vector<16x1xf32> to vector<1x16x1xf32>
      %cst_17 = arith.constant dense<0.000000e+00> : vector<1xf32>
      %40 = vector.multi_reduction <add>, %39, %cst_17 [1, 2] : vector<1x16x1xf32> to vector<1xf32>
      %41 = vector.shape_cast %40 : vector<1xf32> to vector<1x1x1xf32>
      %42 = vector.extract %41[0, 0, 0] : f32 from vector<1x1x1xf32>
      %43 = vector.broadcast %42 : f32 to vector<1x1xf32>
      %44 = vector.shape_cast %43 : vector<1x1xf32> to vector<1x1x1xf32>
      %c0_18 = arith.constant 0 : index
      %c0_19 = arith.constant 0 : index
      %c0_20 = arith.constant 0 : index
      %45 = vector.load %arg4[%c0_18, %c0_19, %c0_20] : memref<1x1x1xf32, #tpu.memory_space<vmem>>, vector<1x1x1xf32>
      tpu.vector_store %arg4[%c0_18, %c0_19, %c0_20], %44 {strides = array<i32>} : memref<1x1x1xf32, #tpu.memory_space<vmem>>, vector<1x1x1xf32>,
    } else {
    }
    return
  }
  func.func @transform_0(%arg0: i32, %arg1: i32) -> (i32, i32) {
    %c1_i32 = arith.constant 1 : i32
    %0 = arith.muli %arg0, %c1_i32 : i32
    %1 = arith.addi %0, %arg1 : i32
    %c0_i32 = arith.constant 0 : i32
    %2 = arith.minsi %1, %c0_i32 : i32
    %c0_i32_0 = arith.constant 0 : i32
    %c0_i32_1 = arith.constant 0 : i32
    return %2, %c0_i32_0 : i32, i32
  }
  func.func @transform_1(%arg0: i32, %arg1: i32) -> (i32, i32) {
    %c1_i32 = arith.constant 1 : i32
    %0 = arith.muli %arg0, %c1_i32 : i32
    %1 = arith.addi %0, %arg1 : i32
    %c0_i32 = arith.constant 0 : i32
    %2 = arith.minsi %1, %c0_i32 : i32
    %c0_i32_0 = arith.constant 0 : i32
    %c0_i32_1 = arith.constant 0 : i32
    return %2, %c0_i32_0 : i32, i32
  }
  func.func @transform_2(%arg0: i32, %arg1: i32) -> (i32, i32, i32) {
    %c0_i32 = arith.constant 0 : i32
    %c0_i32_0 = arith.constant 0 : i32
    %c0_i32_1 = arith.constant 0 : i32
    return %arg0, %c0_i32, %c0_i32_0 : i32, i32, i32
  }
}

</mosaic_0001>

<llo_original>
// kernel: tpu_custom_call.1
$region0: #{tpu_custom_call.1}
  #allocation0 [shape = 'u32[]', space=smem, size = 0x4, offset = 0x4, fixed_abs, tag = 'smem constant byte address 0x4 - core index']
  #allocation1 [shape = 'u32[144,128]{1,0:T(1,128)}', space=vmem, size = 0x12000, scoped, tag = 'internal scratch']
  #allocation2 [shape = 'f32[16,1]{1,0:T(8,128)}', space=vmem, size = 0x2000, scoped, tag = 'scratch operand']
  %s0 = inlined_call_operand.vmem [shape: f32[16,32], index: 0, kind: input, shape index: {}]
  %s1 = inlined_call_operand.vmem [shape: s32[16,1], index: 1, kind: input, shape index: {}]
  %s2 = inlined_call_operand.hbm [shape: f32[1,1,1], index: 2, kind: output, shape index: {}]
  %s3 = sld [smem:[#allocation0]]
  $region26: #{tpu_custom_call.1} parent=0
    _
  %s5 = ssub.s32 1, %s3
  %s6 = scalar_select 0, %s5, %s3
  $region1: #{tpu_custom_call.1} parent=0
    #allocation3 [shape = 'u8[512]{0}', space=vmem, size = 0x400, scoped, tag = 'output window, operand 0, single buffered']
    #allocation4 [shape = 's32[1]{0}', space=sflag, size = 0x4, scoped, tag = 'scoped memory for tpu_custom_call.1']
    %7 = vsyncpa [#allocation4], 0
    // Predicated region
    $region2: #{tpu_custom_call.1} parent=1 // pred_check
      _
    $region3: #{tpu_custom_call.1} parent=1 // pred_check_branch
      %9 = sbr.rel (0) target = $region5
    $region4: #{tpu_custom_call.1} parent=1 // pred_region
      %s10 = sadd.s32 0, 0
      %p11 = scmp.lt.s32.totalorder %s10, 0
      %s12 = scalar_select %p11, %s10, 0
      %s13 = smul.u32 2, %s12
      %p14 = scmp.lt.s32.totalorder %s13, 1
      %s15 = scalar_select %p14, %s13, 1
      %s16 = smul.addr %s15, 8
      %s17 = scalar_lea.vmem %s0, %s16
      %s18 = sadd.s32 0, 0
      %p19 = scmp.lt.s32.totalorder %s18, 0
      %s20 = scalar_select %p19, %s18, 0
      %s21 = smul.u32 2, %s20
    $region5: #{tpu_custom_call.1} parent=1 // pred_fallthru
      _
    // Predicated region
    $region6: #{tpu_custom_call.1} parent=1 // pred_check
      _
    $region7: #{tpu_custom_call.1} parent=1 // pred_check_branch
      %23 = sbr.rel (0) target = $region9
    $region8: #{tpu_custom_call.1} parent=1 // pred_region
      %s24 = sadd.s32 0, 0
      %p25 = scmp.lt.s32.totalorder %s24, 0
      %s26 = scalar_select %p25, %s24, 0
      %s27 = smul.u32 2, %s26
      %p28 = scmp.lt.s32.totalorder %s27, 1
      %s29 = scalar_select %p28, %s27, 1
      %s30 = smul.addr %s29, 8
      %s31 = scalar_lea.vmem %s1, %s30
      %s32 = sadd.s32 0, 0
      %p33 = scmp.lt.s32.totalorder %s32, 0
      %s34 = scalar_select %p33, %s32, 0
      %s35 = smul.u32 2, %s34
    $region9: #{tpu_custom_call.1} parent=1 // pred_fallthru
      _
    %s36 = sadd.s32 0, 0
    %p37 = scmp.lt.s32.totalorder %s36, 0
    %s38 = scalar_select %p37, %s36, 0
    %s39 = smul.u32 2, %s38
    %p40 = scmp.lt.s32.totalorder %s39, 1
    %s41 = scalar_select %p40, %s39, 1
    %s42 = smul.addr %s41, 8
    %s43 = scalar_lea.vmem %s0, %s42
    %s44 = sadd.s32 0, 0
    %p45 = scmp.lt.s32.totalorder %s44, 0
    %s46 = scalar_select %p45, %s44, 0
    %s47 = smul.u32 2, %s46
    %p48 = scmp.lt.s32.totalorder %s47, 1
    %s49 = scalar_select %p48, %s47, 1
    %s50 = smul.addr %s49, 8
    %s51 = scalar_lea.vmem %s1, %s50
    %s52 = sadd.s32 0, 0
    %p53 = scmp.lt.s32.totalorder %s52, 0
    %s54 = scalar_select %p53, %s52, 0
    %s55 = smul.u32 2, %s54
    %p56 = scmp.lt.s32.totalorder %s55, 1
    %s57 = scalar_select %p56, %s55, 1
    %s58 = smul.addr %s57, 8
    %s59 = scalar_lea.vmem %s0, %s58
    %s60 = sadd.s32 0, 0
    %p61 = scmp.lt.s32.totalorder %s60, 0
    %s62 = scalar_select %p61, %s60, 0
    %s63 = smul.u32 2, %s62
    %s64 = sadd.s32 0, 0
    %p65 = scmp.lt.s32.totalorder %s64, 0
    %s66 = scalar_select %p65, %s64, 0
    %s67 = smul.u32 2, %s66
    %p68 = scmp.lt.s32.totalorder %s67, 1
    %s69 = scalar_select %p68, %s67, 1
    %s70 = smul.addr %s69, 8
    %s71 = scalar_lea.vmem %s1, %s70
    %s72 = sadd.s32 0, 0
    %p73 = scmp.lt.s32.totalorder %s72, 0
    %s74 = scalar_select %p73, %s72, 0
    %s75 = smul.u32 2, %s74
    %p76 = scmp.eq.s32.totalorder 0, 0
    // Predicated region
    $region10: #{tpu_custom_call.1} parent=1 // pred_check
      %p77 = pneg %p76
    $region11: #{tpu_custom_call.1} parent=1 // pred_check_branch
      %79 = sbr.rel (%p77) target = $region13
    $region12: #{tpu_custom_call.1} parent=1 // pred_region
      %vm80 = vcmask 7168
      %81 = vst.msk [vmem:[#allocation2] sm:$0xff] %vm80, 0.0
      %82 = vst.msk [vmem:[#allocation2 + $0x8] sm:$0xff] %vm80, 0.0
    $region13: #{tpu_custom_call.1} parent=1 // pred_fallthru
      _
    %v83 = vld [vmem:[%s59] sm:$0xff]
    %v84 = vld [vmem:[%s59 + $0x8] sm:$0xff]
    %v85 = vld [vmem:[%s71] sm:$0xff]
    %v86 = vld [vmem:[%s71 + $0x8] sm:$0xff]
    %s87 = sadd.s32 0, 0
    %v88 = vlaneseq
    %v89 = vshrl.u32 %v88, 7
    %v90 = vadd.s32 %v89, 8
    %s91 = smul.u32 %s87, 16
    %v92 = vstv %s91
    %v93 = vadd.s32 %v89, %v92
    %v94 = vadd.s32 %v90, %v92
    %vm95 = vcmp.lt.s32.totalorder %v93, 16
    %vm96 = vcmp.lt.s32.totalorder %v94, 16
    %vm97 = vcmask 261120
    %v98 = vsel %vm97, %v83, -inf
    %99 = vmax.xlane.f32.xlu0 %v98
    %v100 = vpop.xlane.xlu0 %99
    %v101 = vsel %vm97, %v84, -inf
    %102 = vmax.xlane.f32.xlu0 %v101
    %v103 = vpop.xlane.xlu0 %102
    %v104 = vsub.f32 %v83, %v100
    %v105 = vsub.f32 %v84, %v103
    %v106 = vmul.f32 %v104, 1.442695
    %v107 = vpow.pop %v106
    %v108 = vmul.f32 %v105, 1.442695
    %v109 = vpow.pop %v108
    %v110 = vsel %vm97, %v107, 0.0
    %111 = vadd.xlane.f32.xlu0 %v110
    %v112 = vpop.xlane.xlu0 %111
    %v113 = vsel %vm97, %v109, 0.0
    %114 = vadd.xlane.f32.xlu0 %v113
    %v115 = vpop.xlane.xlu0 %114
    %v116 = vlog2.pop %v112
    %v117 = vmul.f32 %v116, 0.6931472
    %v118 = vlog2.pop %v115
    %v119 = vmul.f32 %v118, 0.6931472
    %v120 = vadd.f32 %v117, %v100
    %v121 = vadd.f32 %v119, %v103
    %v122 = vlaneseq
    %v123 = vand.u32 %v122, 127
    %124 = vset.pattern.permute.xlu0 0
    %125 = vperm.xlu0 %124, %v85
    %v126 = vpop.permute.xlu0 %125
    %127 = vset.pattern.permute.xlu0 0
    %128 = vperm.xlu0 %127, %v86
    %v129 = vpop.permute.xlu0 %128
    %vm130 = vcmp.eq.s32.totalorder %v123, %v126
    %vm131 = vcmp.eq.s32.totalorder %v123, %v129
    %v132 = vsel %vm130, %v83, 0.0
    %v133 = vsel %vm131, %v84, 0.0
    %v134 = vsel %vm97, %v132, 0.0
    %135 = vadd.xlane.f32.xlu0 %v134
    %v136 = vpop.xlane.xlu0 %135
    %v137 = vsel %vm97, %v133, 0.0
    %138 = vadd.xlane.f32.xlu0 %v137
    %v139 = vpop.xlane.xlu0 %138
    %v140 = vld [vmem:[#allocation2] sm:$0xff]
    %v141 = vld [vmem:[#allocation2 + $0x8] sm:$0xff]
    %v142 = vsub.f32 %v120, %v136
    %v143 = vsub.f32 %v121, %v139
    %v144 = vsel %vm95, %v142, 0.0
    %v145 = vsel %vm96, %v143, 0.0
    %v146 = vadd.f32 %v140, %v144
    %v147 = vadd.f32 %v141, %v145
    %vm148 = vcmask 7168
    %149 = vst.msk [vmem:[#allocation2] sm:$0xff] %vm148, %v146
    %150 = vst.msk [vmem:[#allocation2 + $0x8] sm:$0xff] %vm148, %v147
    // Predicated region
    $region14: #{tpu_custom_call.1} parent=1 // pred_check
      %p151 = pneg %p76
    $region15: #{tpu_custom_call.1} parent=1 // pred_check_branch
      %153 = sbr.rel (%p151) target = $region17
    $region16: #{tpu_custom_call.1} parent=1 // pred_region
      %v154 = vld [vmem:[#allocation2] sm:$0xff]
      %v155 = vld [vmem:[#allocation2 + $0x8] sm:$0xff]
      %v156 = vsel %vm148, %v154, 0.0
      %v157 = vsel %vm148, %v155, 0.0
      %v158 = vadd.f32 %v156, %v157
      %159 = vadd.xlane.f32.xlu0 %v158
      %v160 = vpop.xlane.xlu0 %159
      %v161 = vrot.slane %v160, 4
      %v162 = vadd.f32 %v160, %v161
      %v163 = vrot.slane %v162, 2
      %v164 = vadd.f32 %v162, %v163
      %v165 = vrot.slane %v164, 1
      %v166 = vadd.f32 %v164, %v165
      %s167 = vtos %v166
      %v168 = vstv %s167
      %vm169 = vcmask 0
      %170 = vst.msk [vmem:[#allocation3] sm:$0x1] %vm169, %v168
    $region17: #{tpu_custom_call.1} parent=1 // pred_fallthru
      _
    // Predicated region
    $region18: #{tpu_custom_call.1} parent=1 // pred_check
      _
    $region19: #{tpu_custom_call.1} parent=1 // pred_check_branch
      %172 = sbr.rel (0) target = $region21
    $region20: #{tpu_custom_call.1} parent=1 // pred_region
      %s174 = ssub.s32 16, 16
      %175 = vsyncadd [#allocation4], %s174
      %s177 = sshll.u32 [#allocation3], 4
      %s178 = int_to_ptr.vmem [resolvable:$true] %s177
      %180 = dma.vmem_to_hbm [thread:$0]  %s178, 16, %s2, [#allocation4]
    $region21: #{tpu_custom_call.1} parent=1 // pred_fallthru
      _
    // Predicated region
    $region22: #{tpu_custom_call.1} parent=1 // pred_check
      _
    $region23: #{tpu_custom_call.1} parent=1 // pred_check_branch
      %182 = sbr.rel (0) target = $region25
    $region24: #{tpu_custom_call.1} parent=1 // pred_region
      %183 = dma.done [#allocation4], 16
    $region25: #{tpu_custom_call.1} parent=1 // pred_fallthru
      _
    %184 = vsyncpa [#allocation4], 1

</llo_original>
